<compile_context>
chip_gen: v7x
topology: tpu7x:2x2x1
jax: 0.10.0
libtpu: 0.0.40
codegen_flags: <defaults>
</compile_context>

<pallas_src>
import functools

import jax
import jax.numpy as jnp
from jax import lax
from jax.experimental import pallas as pl
from jax.experimental.pallas import tpu as pltpu

EPS = 1e-5


def _add_layernorm_kernel(a_ref, b_ref, wb_ref, o_ref, *, inv_d):
    # a_ref, b_ref, o_ref: (R, D) in storage dtype; wb_ref: (2, D) = [weight; bias].
    x = a_ref[...].astype(jnp.float32) + b_ref[...].astype(jnp.float32)

    # Two-pass mean/variance (matches torch LayerNorm numerics; the extra
    # (R, D) sweep is free in the mem-bound regime).  1/D is a compile-time
    # constant multiply, no VPU divide; rsqrt lands on the EUP slot.
    mean = jnp.sum(x, axis=-1, keepdims=True) * inv_d
    xc = x - mean
    var = jnp.sum(xc * xc, axis=-1, keepdims=True) * inv_d
    inv = lax.rsqrt(var + EPS)

    w = wb_ref[0:1, :].astype(jnp.float32)   # (1, D)
    b = wb_ref[1:2, :].astype(jnp.float32)   # (1, D)
    # Direct form: 4 (R,D) VPU ops, no extra live (R,D) temporary.
    o_ref[...] = ((xc * inv) * w + b).astype(o_ref.dtype)


def _default_block_rows():
    # v5e: 512-row f32 tiles (2 in + 1 out, double-buffered ~9.4 MiB) fit its
    # 16 MiB default scoped VMEM.  v6e/v7x: 1024 rows (~19 MiB) fit their
    # 32 MiB default and halve the per-step overhead count.
    try:
        kind = jax.devices()[0].device_kind.lower()
    except Exception:
        kind = ""
    return 512 if "v5" in kind else 1024


def add_layernorm(x_a, x_b, weight, bias, *, block_rows=None,
                  donate_first_input=False):
    """Fused (x_a + x_b) -> LayerNorm over the last dim (matches the module)."""
    orig_shape = x_a.shape
    d = orig_shape[-1]
    a2 = x_a.reshape(-1, d)                 # keep storage dtype; no f32 up-cast
    b2 = x_b.reshape(-1, d)
    # Pack weight and bias into one (2, D) slab: single BlockSpec / DMA descriptor.
    wb = jnp.concatenate([weight.reshape(1, d), bias.reshape(1, d)], axis=0)
    rows = a2.shape[0]
    if block_rows is None:
        block_rows = _default_block_rows()

    kernel = functools.partial(_add_layernorm_kernel, inv_d=1.0 / d)
    out_shape = jax.ShapeDtypeStruct((rows, d), a2.dtype)
    aliases = {0: 0} if donate_first_input else {}

    if rows <= block_rows:
        # Tiny problem (49 rows here): one grid-less call, whole slabs in VMEM.
        out = pl.pallas_call(
            kernel,
            out_shape=out_shape,
            in_specs=[
                pl.BlockSpec(memory_space=pltpu.VMEM),
                pl.BlockSpec(memory_space=pltpu.VMEM),
                pl.BlockSpec(memory_space=pltpu.VMEM),
            ],
            out_specs=pl.BlockSpec(memory_space=pltpu.VMEM),
            input_output_aliases=aliases,
        )(a2, b2, wb)
    else:
        # Large-row path: parallel row grid so both TensorCores (v7x) split the
        # rows.  Raise the scoped-VMEM limit only when the double-buffered
        # footprint would exceed the most conservative default (v5e, 16 MiB).
        grid = (pl.cdiv(rows, block_rows),)
        itemsize = jnp.dtype(a2.dtype).itemsize
        est_vmem = 2 * 3 * block_rows * d * itemsize + 2 * 2 * d * 4
        compiler_kwargs = dict(dimension_semantics=("parallel",))
        if est_vmem > (14 << 20):
            compiler_kwargs["vmem_limit_bytes"] = int(
                min(48 << 20, est_vmem + (8 << 20)))
        out = pl.pallas_call(
            kernel,
            out_shape=out_shape,
            grid=grid,
            in_specs=[
                pl.BlockSpec((block_rows, d), lambda i: (i, 0)),
                pl.BlockSpec((block_rows, d), lambda i: (i, 0)),
                pl.BlockSpec((2, d), lambda i: (0, 0)),
            ],
            out_specs=pl.BlockSpec((block_rows, d), lambda i: (i, 0)),
            compiler_params=pltpu.CompilerParams(**compiler_kwargs),
            input_output_aliases=aliases,
        )(a2, b2, wb)

    return out.reshape(orig_shape)


if __name__ == "__main__":
    key = jax.random.PRNGKey(0)
    k1, k2, k3, k4 = jax.random.split(key, 4)

    # Shapes implied by the module's forward.
    x272 = jax.random.normal(k1, (1, 7, 7, 768), dtype=jnp.float32)
    x279 = jax.random.normal(k2, (1, 7, 7, 768), dtype=jnp.float32)

    # LayerNorm((768,), elementwise_affine=True) parameters, deterministic init.
    weight = 1.0 + 0.01 * jax.random.normal(k3, (768,), dtype=jnp.float32)
    bias = 0.01 * jax.random.normal(k4, (768,), dtype=jnp.float32)

    # Reference in plain JAX (two-pass variance, like torch LayerNorm).
    xs = x272 + x279
    mean = jnp.mean(xs, axis=-1, keepdims=True)
    var = jnp.mean((xs - mean) ** 2, axis=-1, keepdims=True)
    ref = (xs - mean) / jnp.sqrt(var + EPS) * weight + bias

    # Tiny (grid-less) path — the actual module instance.
    out = add_layernorm(x272, x279, weight, bias)
    jax.block_until_ready(out)
    assert out.shape == ref.shape and out.dtype == ref.dtype
    assert jnp.allclose(out, ref, atol=1e-4, rtol=1e-5), "tiny-path mismatch"

    # Exercise the grid path too (force it with a small block_rows), including
    # a partial final block (49 rows, 16-row tiles).
    out_grid = add_layernorm(x272, x279, weight, bias, block_rows=16)
    jax.block_until_ready(out_grid)
    assert jnp.allclose(out_grid, ref, atol=1e-4, rtol=1e-5), "grid-path mismatch"

    print("KERNEL_OK")
</pallas_src>

<mosaic_0001>
module attributes {stable_mosaic.version = 11 : i64} {
  func.func @_add_layernorm_kernel(%arg0: memref<49x768xf32, #tpu.memory_space<vmem>>, %arg1: memref<49x768xf32, #tpu.memory_space<vmem>>, %arg2: memref<2x768xf32, #tpu.memory_space<vmem>>, %arg3: memref<49x768xf32, #tpu.memory_space<vmem>>) attributes {dimension_semantics = [], scalar_prefetch = 0 : i64, scratch_operands = 0 : i64, tpu.core_type = #tpu.core_type<tc>} {
    %c0 = arith.constant 0 : index
    %c0_0 = arith.constant 0 : index
    %0 = vector.load %arg0[%c0, %c0_0] : memref<49x768xf32, #tpu.memory_space<vmem>>, vector<49x768xf32>
    %c0_1 = arith.constant 0 : index
    %c0_2 = arith.constant 0 : index
    %1 = vector.load %arg1[%c0_1, %c0_2] : memref<49x768xf32, #tpu.memory_space<vmem>>, vector<49x768xf32>
    %2 = arith.addf %0, %1 : vector<49x768xf32>
    %cst = arith.constant dense<0.000000e+00> : vector<49xf32>
    %3 = vector.multi_reduction <add>, %2, %cst [1] : vector<49x768xf32> to vector<49xf32>
    %4 = vector.shape_cast %3 : vector<49xf32> to vector<49x1xf32>
    %cst_3 = arith.constant 0.00130208337 : f32
    %5 = vector.broadcast %cst_3 : f32 to vector<49x1xf32>
    %6 = arith.mulf %4, %5 : vector<49x1xf32>
    %7 = vector.broadcast %6 : vector<49x1xf32> to vector<49x768xf32>
    %8 = arith.subf %2, %7 : vector<49x768xf32>
    %9 = arith.mulf %8, %8 : vector<49x768xf32>
    %cst_4 = arith.constant dense<0.000000e+00> : vector<49xf32>
    %10 = vector.multi_reduction <add>, %9, %cst_4 [1] : vector<49x768xf32> to vector<49xf32>
    %11 = vector.shape_cast %10 : vector<49xf32> to vector<49x1xf32>
    %cst_5 = arith.constant 0.00130208337 : f32
    %12 = vector.broadcast %cst_5 : f32 to vector<49x1xf32>
    %13 = arith.mulf %11, %12 : vector<49x1xf32>
    %cst_6 = arith.constant 9.99999974E-6 : f32
    %14 = vector.broadcast %cst_6 : f32 to vector<49x1xf32>
    %15 = arith.addf %13, %14 : vector<49x1xf32>
    %16 = math.rsqrt %15 : vector<49x1xf32>
    %c0_7 = arith.constant 0 : index
    %c0_8 = arith.constant 0 : index
    %17 = vector.load %arg2[%c0_7, %c0_8] : memref<2x768xf32, #tpu.memory_space<vmem>>, vector<1x768xf32>
    %c1 = arith.constant 1 : index
    %c0_9 = arith.constant 0 : index
    %18 = vector.load %arg2[%c1, %c0_9] : memref<2x768xf32, #tpu.memory_space<vmem>>, vector<1x768xf32>
    %19 = vector.broadcast %16 : vector<49x1xf32> to vector<49x768xf32>
    %20 = arith.mulf %8, %19 : vector<49x768xf32>
    %21 = vector.broadcast %17 : vector<1x768xf32> to vector<49x768xf32>
    %22 = arith.mulf %20, %21 : vector<49x768xf32>
    %23 = vector.broadcast %18 : vector<1x768xf32> to vector<49x768xf32>
    %24 = arith.addf %22, %23 : vector<49x768xf32>
    %c0_10 = arith.constant 0 : index
    %c0_11 = arith.constant 0 : index
    %25 = vector.load %arg3[%c0_10, %c0_11] : memref<49x768xf32, #tpu.memory_space<vmem>>, vector<49x768xf32>
    tpu.vector_store %arg3[%c0_10, %c0_11], %24 {strides = array<i32>} : memref<49x768xf32, #tpu.memory_space<vmem>>, vector<49x768xf32>,
    return
  }
}

</mosaic_0001>

<llo_original>
// kernel: tpu_custom_call.1
$region0: #{tpu_custom_call.1}
  #allocation0 [shape = 'u32[]', space=smem, size = 0x4, offset = 0x4, fixed_abs, tag = 'smem constant byte address 0x4 - core index']
  #allocation1 [shape = 'u32[144,128]{1,0:T(1,128)}', space=vmem, size = 0x12000, scoped, tag = 'internal scratch']
  %s0 = inlined_call_operand.hbm [shape: f32[49,768], index: 0, kind: input, shape index: {}]
  %s1 = inlined_call_operand.hbm [shape: f32[49,768], index: 1, kind: input, shape index: {}]
  %s2 = inlined_call_operand.hbm [shape: f32[2,768], index: 2, kind: input, shape index: {}]
  %s3 = inlined_call_operand.hbm [shape: f32[49,768], index: 3, kind: output, shape index: {}]
  %s4 = sld [smem:[#allocation0]]
  $region34: #{tpu_custom_call.1} parent=0
    _
  %s6 = ssub.s32 1, %s4
  %s7 = scalar_select 0, %s6, %s4
  $region1: #{tpu_custom_call.1} parent=0
    #allocation2 [shape = 'u8[172032]{0}', space=vmem, size = 0x2a000, scoped, tag = 'input window, operand 0, single buffered']
    #allocation3 [shape = 's32[1]{0}', space=sflag, size = 0x4, scoped, tag = 'scoped memory for tpu_custom_call.1']
    #allocation4 [shape = 's32[1]{0}', space=sflag, size = 0x4, scoped, tag = 'scoped memory for tpu_custom_call.1']
    #allocation5 [shape = 'u8[172032]{0}', space=vmem, size = 0x2a000, scoped, tag = 'input window, operand 1, single buffered']
    #allocation6 [shape = 's32[1]{0}', space=sflag, size = 0x4, scoped, tag = 'scoped memory for tpu_custom_call.1']
    #allocation7 [shape = 'u8[6144]{0}', space=vmem, size = 0x1800, scoped, tag = 'input window, operand 2, single buffered']
    #allocation8 [shape = 'u8[172032]{0}', space=vmem, size = 0x2a000, scoped, tag = 'output window, operand 0, single buffered']
    %8 = vsyncpa [#allocation3], 0
    %9 = vsyncpa [#allocation6], 0
    %10 = vsyncpa [#allocation4], 0
    // Predicated region
    $region2: #{tpu_custom_call.1} parent=1 // pred_check
      _
    $region3: #{tpu_custom_call.1} parent=1 // pred_check_branch
      %12 = sbr.rel (0) target = $region5
    $region4: #{tpu_custom_call.1} parent=1 // pred_region
      %s14 = ssub.s32 5376, 5376
      %15 = vsyncadd [#allocation3], %s14
      %s16 = sshll.u32 [#allocation2], 4
      %s17 = int_to_ptr.vmem [resolvable:$true] %s16
      %22 = dma.hbm_to_vmem [thread:$0]  %s0, 5376, %s17, [#allocation3], 768, 768, 48
    $region5: #{tpu_custom_call.1} parent=1 // pred_fallthru
      _
    // Predicated region
    $region6: #{tpu_custom_call.1} parent=1 // pred_check
      _
    $region7: #{tpu_custom_call.1} parent=1 // pred_check_branch
      %24 = sbr.rel (0) target = $region9
    $region8: #{tpu_custom_call.1} parent=1 // pred_region
      %s26 = ssub.s32 5376, 5376
      %27 = vsyncadd [#allocation6], %s26
      %s28 = sshll.u32 [#allocation5], 4
      %s29 = int_to_ptr.vmem [resolvable:$true] %s28
      %34 = dma.hbm_to_vmem [thread:$0]  %s1, 5376, %s29, [#allocation6], 768, 768, 48
    $region9: #{tpu_custom_call.1} parent=1 // pred_fallthru
      _
    // Predicated region
    $region10: #{tpu_custom_call.1} parent=1 // pred_check
      _
    $region11: #{tpu_custom_call.1} parent=1 // pred_check_branch
      %36 = sbr.rel (0) target = $region13
    $region12: #{tpu_custom_call.1} parent=1 // pred_region
      %s38 = ssub.s32 192, 192
      %39 = vsyncadd [#allocation6], %s38
      %s41 = sshll.u32 [#allocation7], 4
      %s42 = int_to_ptr.vmem [resolvable:$true] %s41
      %44 = dma.hbm_to_vmem [thread:$0]  %s2, 192, %s42, [#allocation6]
    $region13: #{tpu_custom_call.1} parent=1 // pred_fallthru
      _
    // Predicated region
    $region14: #{tpu_custom_call.1} parent=1 // pred_check
      _
    $region15: #{tpu_custom_call.1} parent=1 // pred_check_branch
      %46 = sbr.rel (0) target = $region17
    $region16: #{tpu_custom_call.1} parent=1 // pred_region
      %47 = dma.done [#allocation3], 5376
    $region17: #{tpu_custom_call.1} parent=1 // pred_fallthru
      _
    // Predicated region
    $region18: #{tpu_custom_call.1} parent=1 // pred_check
      _
    $region19: #{tpu_custom_call.1} parent=1 // pred_check_branch
      %49 = sbr.rel (0) target = $region21
    $region20: #{tpu_custom_call.1} parent=1 // pred_region
      %50 = dma.done [#allocation6], 5376
    $region21: #{tpu_custom_call.1} parent=1 // pred_fallthru
      _
    // Predicated region
    $region22: #{tpu_custom_call.1} parent=1 // pred_check
      _
    $region23: #{tpu_custom_call.1} parent=1 // pred_check_branch
      %52 = sbr.rel (0) target = $region25
    $region24: #{tpu_custom_call.1} parent=1 // pred_region
      %53 = dma.done [#allocation6], 192
    $region25: #{tpu_custom_call.1} parent=1 // pred_fallthru
      _
    %v54 = vld [vmem:[#allocation2] sm:$0xff]
    %v55 = vld [vmem:[#allocation2 + $0x8] sm:$0xff]
    %v56 = vld [vmem:[#allocation2 + $0x10] sm:$0xff]
    %v57 = vld [vmem:[#allocation2 + $0x18] sm:$0xff]
    %v58 = vld [vmem:[#allocation2 + $0x20] sm:$0xff]
    %v59 = vld [vmem:[#allocation2 + $0x28] sm:$0xff]
    %v60 = vld [vmem:[#allocation2 + $0x30] sm:$0xff]
    %v61 = vld [vmem:[#allocation2 + $0x38] sm:$0xff]
    %v62 = vld [vmem:[#allocation2 + $0x40] sm:$0xff]
    %v63 = vld [vmem:[#allocation2 + $0x48] sm:$0xff]
    %v64 = vld [vmem:[#allocation2 + $0x50] sm:$0xff]
    %v65 = vld [vmem:[#allocation2 + $0x58] sm:$0xff]
    %v66 = vld [vmem:[#allocation2 + $0x60] sm:$0xff]
    %v67 = vld [vmem:[#allocation2 + $0x68] sm:$0xff]
    %v68 = vld [vmem:[#allocation2 + $0x70] sm:$0xff]
    %v69 = vld [vmem:[#allocation2 + $0x78] sm:$0xff]
    %v70 = vld [vmem:[#allocation2 + $0x80] sm:$0xff]
    %v71 = vld [vmem:[#allocation2 + $0x88] sm:$0xff]
    %v72 = vld [vmem:[#allocation2 + $0x90] sm:$0xff]
    %v73 = vld [vmem:[#allocation2 + $0x98] sm:$0xff]
    %v74 = vld [vmem:[#allocation2 + $0xa0] sm:$0xff]
    %v75 = vld [vmem:[#allocation2 + $0xa8] sm:$0xff]
    %v76 = vld [vmem:[#allocation2 + $0xb0] sm:$0xff]
    %v77 = vld [vmem:[#allocation2 + $0xb8] sm:$0xff]
    %v78 = vld [vmem:[#allocation2 + $0xc0] sm:$0xff]
    %v79 = vld [vmem:[#allocation2 + $0xc8] sm:$0xff]
    %v80 = vld [vmem:[#allocation2 + $0xd0] sm:$0xff]
    %v81 = vld [vmem:[#allocation2 + $0xd8] sm:$0xff]
    %v82 = vld [vmem:[#allocation2 + $0xe0] sm:$0xff]
    %v83 = vld [vmem:[#allocation2 + $0xe8] sm:$0xff]
    %v84 = vld [vmem:[#allocation2 + $0xf0] sm:$0xff]
    %v85 = vld [vmem:[#allocation2 + $0xf8] sm:$0xff]
    %v86 = vld [vmem:[#allocation2 + $0x100] sm:$0xff]
    %v87 = vld [vmem:[#allocation2 + $0x108] sm:$0xff]
    %v88 = vld [vmem:[#allocation2 + $0x110] sm:$0xff]
    %v89 = vld [vmem:[#allocation2 + $0x118] sm:$0xff]
    %v90 = vld [vmem:[#allocation2 + $0x120] sm:$0x1]
    %v91 = vld [vmem:[#allocation2 + $0x128] sm:$0x1]
    %v92 = vld [vmem:[#allocation2 + $0x130] sm:$0x1]
    %v93 = vld [vmem:[#allocation2 + $0x138] sm:$0x1]
    %v94 = vld [vmem:[#allocation2 + $0x140] sm:$0x1]
    %v95 = vld [vmem:[#allocation2 + $0x148] sm:$0x1]
    %v96 = vld [vmem:[#allocation5] sm:$0xff]
    %v97 = vld [vmem:[#allocation5 + $0x8] sm:$0xff]
    %v98 = vld [vmem:[#allocation5 + $0x10] sm:$0xff]
    %v99 = vld [vmem:[#allocation5 + $0x18] sm:$0xff]
    %v100 = vld [vmem:[#allocation5 + $0x20] sm:$0xff]
    %v101 = vld [vmem:[#allocation5 + $0x28] sm:$0xff]
    %v102 = vld [vmem:[#allocation5 + $0x30] sm:$0xff]
    %v103 = vld [vmem:[#allocation5 + $0x38] sm:$0xff]
    %v104 = vld [vmem:[#allocation5 + $0x40] sm:$0xff]
    %v105 = vld [vmem:[#allocation5 + $0x48] sm:$0xff]
    %v106 = vld [vmem:[#allocation5 + $0x50] sm:$0xff]
    %v107 = vld [vmem:[#allocation5 + $0x58] sm:$0xff]
    %v108 = vld [vmem:[#allocation5 + $0x60] sm:$0xff]
    %v109 = vld [vmem:[#allocation5 + $0x68] sm:$0xff]
    %v110 = vld [vmem:[#allocation5 + $0x70] sm:$0xff]
    %v111 = vld [vmem:[#allocation5 + $0x78] sm:$0xff]
    %v112 = vld [vmem:[#allocation5 + $0x80] sm:$0xff]
    %v113 = vld [vmem:[#allocation5 + $0x88] sm:$0xff]
    %v114 = vld [vmem:[#allocation5 + $0x90] sm:$0xff]
    %v115 = vld [vmem:[#allocation5 + $0x98] sm:$0xff]
    %v116 = vld [vmem:[#allocation5 + $0xa0] sm:$0xff]
    %v117 = vld [vmem:[#allocation5 + $0xa8] sm:$0xff]
    %v118 = vld [vmem:[#allocation5 + $0xb0] sm:$0xff]
    %v119 = vld [vmem:[#allocation5 + $0xb8] sm:$0xff]
    %v120 = vld [vmem:[#allocation5 + $0xc0] sm:$0xff]
    %v121 = vld [vmem:[#allocation5 + $0xc8] sm:$0xff]
    %v122 = vld [vmem:[#allocation5 + $0xd0] sm:$0xff]
    %v123 = vld [vmem:[#allocation5 + $0xd8] sm:$0xff]
    %v124 = vld [vmem:[#allocation5 + $0xe0] sm:$0xff]
    %v125 = vld [vmem:[#allocation5 + $0xe8] sm:$0xff]
    %v126 = vld [vmem:[#allocation5 + $0xf0] sm:$0xff]
    %v127 = vld [vmem:[#allocation5 + $0xf8] sm:$0xff]
    %v128 = vld [vmem:[#allocation5 + $0x100] sm:$0xff]
    %v129 = vld [vmem:[#allocation5 + $0x108] sm:$0xff]
    %v130 = vld [vmem:[#allocation5 + $0x110] sm:$0xff]
    %v131 = vld [vmem:[#allocation5 + $0x118] sm:$0xff]
    %v132 = vld [vmem:[#allocation5 + $0x120] sm:$0x1]
    %v133 = vld [vmem:[#allocation5 + $0x128] sm:$0x1]
    %v134 = vld [vmem:[#allocation5 + $0x130] sm:$0x1]
    %v135 = vld [vmem:[#allocation5 + $0x138] sm:$0x1]
    %v136 = vld [vmem:[#allocation5 + $0x140] sm:$0x1]
    %v137 = vld [vmem:[#allocation5 + $0x148] sm:$0x1]
    %v138 = vadd.f32 %v54, %v96
    %v139 = vadd.f32 %v55, %v97
    %v140 = vadd.f32 %v56, %v98
    %v141 = vadd.f32 %v57, %v99
    %v142 = vadd.f32 %v58, %v100
    %v143 = vadd.f32 %v59, %v101
    %v144 = vadd.f32 %v60, %v102
    %v145 = vadd.f32 %v61, %v103
    %v146 = vadd.f32 %v62, %v104
    %v147 = vadd.f32 %v63, %v105
    %v148 = vadd.f32 %v64, %v106
    %v149 = vadd.f32 %v65, %v107
    %v150 = vadd.f32 %v66, %v108
    %v151 = vadd.f32 %v67, %v109
    %v152 = vadd.f32 %v68, %v110
    %v153 = vadd.f32 %v69, %v111
    %v154 = vadd.f32 %v70, %v112
    %v155 = vadd.f32 %v71, %v113
    %v156 = vadd.f32 %v72, %v114
    %v157 = vadd.f32 %v73, %v115
    %v158 = vadd.f32 %v74, %v116
    %v159 = vadd.f32 %v75, %v117
    %v160 = vadd.f32 %v76, %v118
    %v161 = vadd.f32 %v77, %v119
    %v162 = vadd.f32 %v78, %v120
    %v163 = vadd.f32 %v79, %v121
    %v164 = vadd.f32 %v80, %v122
    %v165 = vadd.f32 %v81, %v123
    %v166 = vadd.f32 %v82, %v124
    %v167 = vadd.f32 %v83, %v125
    %v168 = vadd.f32 %v84, %v126
    %v169 = vadd.f32 %v85, %v127
    %v170 = vadd.f32 %v86, %v128
    %v171 = vadd.f32 %v87, %v129
    %v172 = vadd.f32 %v88, %v130
    %v173 = vadd.f32 %v89, %v131
    %v174 = vadd.f32 %v90, %v132
    %v175 = vadd.f32 %v91, %v133
    %v176 = vadd.f32 %v92, %v134
    %v177 = vadd.f32 %v93, %v135
    %v178 = vadd.f32 %v94, %v136
    %v179 = vadd.f32 %v95, %v137
    %v180 = vadd.f32 %v138, %v139
    %v181 = vadd.f32 %v180, %v140
    %v182 = vadd.f32 %v181, %v141
    %v183 = vadd.f32 %v182, %v142
    %v184 = vadd.f32 %v183, %v143
    %185 = vadd.xlane.f32.xlu0 %v184
    %v186 = vpop.xlane.xlu0 %185
    %v187 = vadd.f32 %v144, %v145
    %v188 = vadd.f32 %v187, %v146
    %v189 = vadd.f32 %v188, %v147
    %v190 = vadd.f32 %v189, %v148
    %v191 = vadd.f32 %v190, %v149
    %192 = vadd.xlane.f32.xlu0 %v191
    %v193 = vpop.xlane.xlu0 %192
    %v194 = vadd.f32 %v150, %v151
    %v195 = vadd.f32 %v194, %v152
    %v196 = vadd.f32 %v195, %v153
    %v197 = vadd.f32 %v196, %v154
    %v198 = vadd.f32 %v197, %v155
    %199 = vadd.xlane.f32.xlu0 %v198
    %v200 = vpop.xlane.xlu0 %199
    %v201 = vadd.f32 %v156, %v157
    %v202 = vadd.f32 %v201, %v158
    %v203 = vadd.f32 %v202, %v159
    %v204 = vadd.f32 %v203, %v160
    %v205 = vadd.f32 %v204, %v161
    %206 = vadd.xlane.f32.xlu0 %v205
    %v207 = vpop.xlane.xlu0 %206
    %v208 = vadd.f32 %v162, %v163
    %v209 = vadd.f32 %v208, %v164
    %v210 = vadd.f32 %v209, %v165
    %v211 = vadd.f32 %v210, %v166
    %v212 = vadd.f32 %v211, %v167
    %213 = vadd.xlane.f32.xlu0 %v212
    %v214 = vpop.xlane.xlu0 %213
    %v215 = vadd.f32 %v168, %v169
    %v216 = vadd.f32 %v215, %v170
    %v217 = vadd.f32 %v216, %v171
    %v218 = vadd.f32 %v217, %v172
    %v219 = vadd.f32 %v218, %v173
    %220 = vadd.xlane.f32.xlu0 %v219
    %v221 = vpop.xlane.xlu0 %220
    %vm222 = vcmask 1040384
    %v223 = vsel %vm222, %v174, 0.0
    %v224 = vsel %vm222, %v175, 0.0
    %v225 = vadd.f32 %v223, %v224
    %v226 = vsel %vm222, %v176, 0.0
    %v227 = vadd.f32 %v225, %v226
    %v228 = vsel %vm222, %v177, 0.0
    %v229 = vadd.f32 %v227, %v228
    %v230 = vsel %vm222, %v178, 0.0
    %v231 = vadd.f32 %v229, %v230
    %v232 = vsel %vm222, %v179, 0.0
    %v233 = vadd.f32 %v231, %v232
    %234 = vadd.xlane.f32.xlu0 %v233
    %v235 = vpop.xlane.xlu0 %234
    %v236 = vmul.f32 %v186, 0.0013020834
    %v237 = vmul.f32 %v193, 0.0013020834
    %v238 = vmul.f32 %v200, 0.0013020834
    %v239 = vmul.f32 %v207, 0.0013020834
    %v240 = vmul.f32 %v214, 0.0013020834
    %v241 = vmul.f32 %v221, 0.0013020834
    %v242 = vmul.f32 %v235, 0.0013020834
    %v243 = vsub.f32 %v138, %v236
    %v244 = vsub.f32 %v139, %v236
    %v245 = vsub.f32 %v140, %v236
    %v246 = vsub.f32 %v141, %v236
    %v247 = vsub.f32 %v142, %v236
    %v248 = vsub.f32 %v143, %v236
    %v249 = vsub.f32 %v144, %v237
    %v250 = vsub.f32 %v145, %v237
    %v251 = vsub.f32 %v146, %v237
    %v252 = vsub.f32 %v147, %v237
    %v253 = vsub.f32 %v148, %v237
    %v254 = vsub.f32 %v149, %v237
    %v255 = vsub.f32 %v150, %v238
    %v256 = vsub.f32 %v151, %v238
    %v257 = vsub.f32 %v152, %v238
    %v258 = vsub.f32 %v153, %v238
    %v259 = vsub.f32 %v154, %v238
    %v260 = vsub.f32 %v155, %v238
    %v261 = vsub.f32 %v156, %v239
    %v262 = vsub.f32 %v157, %v239
    %v263 = vsub.f32 %v158, %v239
    %v264 = vsub.f32 %v159, %v239
    %v265 = vsub.f32 %v160, %v239
    %v266 = vsub.f32 %v161, %v239
    %v267 = vsub.f32 %v162, %v240
    %v268 = vsub.f32 %v163, %v240
    %v269 = vsub.f32 %v164, %v240
    %v270 = vsub.f32 %v165, %v240
    %v271 = vsub.f32 %v166, %v240
    %v272 = vsub.f32 %v167, %v240
    %v273 = vsub.f32 %v168, %v241
    %v274 = vsub.f32 %v169, %v241
    %v275 = vsub.f32 %v170, %v241
    %v276 = vsub.f32 %v171, %v241
    %v277 = vsub.f32 %v172, %v241
    %v278 = vsub.f32 %v173, %v241
    %v279 = vsub.f32 %v174, %v242
    %v280 = vsub.f32 %v175, %v242
    %v281 = vsub.f32 %v176, %v242
    %v282 = vsub.f32 %v177, %v242
    %v283 = vsub.f32 %v178, %v242
    %v284 = vsub.f32 %v179, %v242
    %v285 = vmul.f32 %v243, %v243
    %v286 = vmul.f32 %v244, %v244
    %v287 = vmul.f32 %v245, %v245
    %v288 = vmul.f32 %v246, %v246
    %v289 = vmul.f32 %v247, %v247
    %v290 = vmul.f32 %v248, %v248
    %v291 = vmul.f32 %v249, %v249
    %v292 = vmul.f32 %v250, %v250
    %v293 = vmul.f32 %v251, %v251
    %v294 = vmul.f32 %v252, %v252
    %v295 = vmul.f32 %v253, %v253
    %v296 = vmul.f32 %v254, %v254
    %v297 = vmul.f32 %v255, %v255
    %v298 = vmul.f32 %v256, %v256
    %v299 = vmul.f32 %v257, %v257
    %v300 = vmul.f32 %v258, %v258
    %v301 = vmul.f32 %v259, %v259
    %v302 = vmul.f32 %v260, %v260
    %v303 = vmul.f32 %v261, %v261
    %v304 = vmul.f32 %v262, %v262
    %v305 = vmul.f32 %v263, %v263
    %v306 = vmul.f32 %v264, %v264
    %v307 = vmul.f32 %v265, %v265
    %v308 = vmul.f32 %v266, %v266
    %v309 = vmul.f32 %v267, %v267
    %v310 = vmul.f32 %v268, %v268
    %v311 = vmul.f32 %v269, %v269
    %v312 = vmul.f32 %v270, %v270
    %v313 = vmul.f32 %v271, %v271
    %v314 = vmul.f32 %v272, %v272
    %v315 = vmul.f32 %v273, %v273
    %v316 = vmul.f32 %v274, %v274
    %v317 = vmul.f32 %v275, %v275
    %v318 = vmul.f32 %v276, %v276
    %v319 = vmul.f32 %v277, %v277
    %v320 = vmul.f32 %v278, %v278
    %v321 = vmul.f32 %v279, %v279
    %v322 = vmul.f32 %v280, %v280
    %v323 = vmul.f32 %v281, %v281
    %v324 = vmul.f32 %v282, %v282
    %v325 = vmul.f32 %v283, %v283
    %v326 = vmul.f32 %v284, %v284
    %v327 = vadd.f32 %v285, %v286
    %v328 = vadd.f32 %v327, %v287
    %v329 = vadd.f32 %v328, %v288
    %v330 = vadd.f32 %v329, %v289
    %v331 = vadd.f32 %v330, %v290
    %332 = vadd.xlane.f32.xlu0 %v331
    %v333 = vpop.xlane.xlu0 %332
    %v334 = vadd.f32 %v291, %v292
    %v335 = vadd.f32 %v334, %v293
    %v336 = vadd.f32 %v335, %v294
    %v337 = vadd.f32 %v336, %v295
    %v338 = vadd.f32 %v337, %v296
    %339 = vadd.xlane.f32.xlu0 %v338
    %v340 = vpop.xlane.xlu0 %339
    %v341 = vadd.f32 %v297, %v298
    %v342 = vadd.f32 %v341, %v299
    %v343 = vadd.f32 %v342, %v300
    %v344 = vadd.f32 %v343, %v301
    %v345 = vadd.f32 %v344, %v302
    %346 = vadd.xlane.f32.xlu0 %v345
    %v347 = vpop.xlane.xlu0 %346
    %v348 = vadd.f32 %v303, %v304
    %v349 = vadd.f32 %v348, %v305
    %v350 = vadd.f32 %v349, %v306
    %v351 = vadd.f32 %v350, %v307
    %v352 = vadd.f32 %v351, %v308
    %353 = vadd.xlane.f32.xlu0 %v352
    %v354 = vpop.xlane.xlu0 %353
    %v355 = vadd.f32 %v309, %v310
    %v356 = vadd.f32 %v355, %v311
    %v357 = vadd.f32 %v356, %v312
    %v358 = vadd.f32 %v357, %v313
    %v359 = vadd.f32 %v358, %v314
    %360 = vadd.xlane.f32.xlu0 %v359
    %v361 = vpop.xlane.xlu0 %360
    %v362 = vadd.f32 %v315, %v316
    %v363 = vadd.f32 %v362, %v317
    %v364 = vadd.f32 %v363, %v318
    %v365 = vadd.f32 %v364, %v319
    %v366 = vadd.f32 %v365, %v320
    %367 = vadd.xlane.f32.xlu0 %v366
    %v368 = vpop.xlane.xlu0 %367
    %v369 = vsel %vm222, %v321, 0.0
    %v370 = vsel %vm222, %v322, 0.0
    %v371 = vadd.f32 %v369, %v370
    %v372 = vsel %vm222, %v323, 0.0
    %v373 = vadd.f32 %v371, %v372
    %v374 = vsel %vm222, %v324, 0.0
    %v375 = vadd.f32 %v373, %v374
    %v376 = vsel %vm222, %v325, 0.0
    %v377 = vadd.f32 %v375, %v376
    %v378 = vsel %vm222, %v326, 0.0
    %v379 = vadd.f32 %v377, %v378
    %380 = vadd.xlane.f32.xlu0 %v379
    %v381 = vpop.xlane.xlu0 %380
    %v382 = vmul.f32 %v333, 0.0013020834
    %v383 = vmul.f32 %v340, 0.0013020834
    %v384 = vmul.f32 %v347, 0.0013020834
    %v385 = vmul.f32 %v354, 0.0013020834
    %v386 = vmul.f32 %v361, 0.0013020834
    %v387 = vmul.f32 %v368, 0.0013020834
    %v388 = vmul.f32 %v381, 0.0013020834
    %v389 = vadd.f32 %v382, 1e-05
    %v390 = vadd.f32 %v383, 1e-05
    %v391 = vadd.f32 %v384, 1e-05
    %v392 = vadd.f32 %v385, 1e-05
    %v393 = vadd.f32 %v386, 1e-05
    %v394 = vadd.f32 %v387, 1e-05
    %v395 = vadd.f32 %v388, 1e-05
    %v396 = vrsqrt.pop %v389
    %v397 = vrsqrt.pop %v390
    %v398 = vrsqrt.pop %v391
    %v399 = vrsqrt.pop %v392
    %v400 = vrsqrt.pop %v393
    %v401 = vrsqrt.pop %v394
    %v402 = vrsqrt.pop %v395
    %v403 = vld [vmem:[#allocation7] ss:$2 sm:$0x3f]
    %s404 = scalar_lea.vmem [#allocation7], 1
    %v405 = vld [vmem:[%s404] ss:$2 sm:$0x3f]
    %v406 = vmul.f32 %v243, %v396
    %v407 = vmul.f32 %v244, %v396
    %v408 = vmul.f32 %v245, %v396
    %v409 = vmul.f32 %v246, %v396
    %v410 = vmul.f32 %v247, %v396
    %v411 = vmul.f32 %v248, %v396
    %v412 = vmul.f32 %v249, %v397
    %v413 = vmul.f32 %v250, %v397
    %v414 = vmul.f32 %v251, %v397
    %v415 = vmul.f32 %v252, %v397
    %v416 = vmul.f32 %v253, %v397
    %v417 = vmul.f32 %v254, %v397
    %v418 = vmul.f32 %v255, %v398
    %v419 = vmul.f32 %v256, %v398
    %v420 = vmul.f32 %v257, %v398
    %v421 = vmul.f32 %v258, %v398
    %v422 = vmul.f32 %v259, %v398
    %v423 = vmul.f32 %v260, %v398
    %v424 = vmul.f32 %v261, %v399
    %v425 = vmul.f32 %v262, %v399
    %v426 = vmul.f32 %v263, %v399
    %v427 = vmul.f32 %v264, %v399
    %v428 = vmul.f32 %v265, %v399
    %v429 = vmul.f32 %v266, %v399
    %v430 = vmul.f32 %v267, %v400
    %v431 = vmul.f32 %v268, %v400
    %v432 = vmul.f32 %v269, %v400
    %v433 = vmul.f32 %v270, %v400
    %v434 = vmul.f32 %v271, %v400
    %v435 = vmul.f32 %v272, %v400
    %v436 = vmul.f32 %v273, %v401
    %v437 = vmul.f32 %v274, %v401
    %v438 = vmul.f32 %v275, %v401
    %v439 = vmul.f32 %v276, %v401
    %v440 = vmul.f32 %v277, %v401
    %v441 = vmul.f32 %v278, %v401
    %v442 = vmul.f32 %v279, %v402
    %v443 = vmul.f32 %v280, %v402
    %v444 = vmul.f32 %v281, %v402
    %v445 = vmul.f32 %v282, %v402
    %v446 = vmul.f32 %v283, %v402
    %v447 = vmul.f32 %v284, %v402
    %v449 = vlaneseq
    %v450 = vshrl.u32 %v449, 7
    %v451 = vsub.s32 0, %v450
    %v452 = vrot.slane %v403, %v451
    %v453 = vlaneseq
    %v454 = vshrl.u32 %v453, 7
    %v455 = vsub.s32 1, %v454
    %v456 = vrot.slane %v403, %v455
    %v457 = vlaneseq
    %v458 = vshrl.u32 %v457, 7
    %v459 = vsub.s32 2, %v458
    %v460 = vrot.slane %v403, %v459
    %v461 = vlaneseq
    %v462 = vshrl.u32 %v461, 7
    %v463 = vsub.s32 3, %v462
    %v464 = vrot.slane %v403, %v463
    %v465 = vlaneseq
    %v466 = vshrl.u32 %v465, 7
    %v467 = vsub.s32 4, %v466
    %v468 = vrot.slane %v403, %v467
    %v469 = vlaneseq
    %v470 = vshrl.u32 %v469, 7
    %v471 = vsub.s32 5, %v470
    %v472 = vrot.slane %v403, %v471
    %v479 = vmul.f32 %v406, %v452
    %v480 = vmul.f32 %v407, %v456
    %v481 = vmul.f32 %v408, %v460
    %v482 = vmul.f32 %v409, %v464
    %v483 = vmul.f32 %v410, %v468
    %v484 = vmul.f32 %v411, %v472
    %v485 = vmul.f32 %v412, %v452
    %v486 = vmul.f32 %v413, %v456
    %v487 = vmul.f32 %v414, %v460
    %v488 = vmul.f32 %v415, %v464
    %v489 = vmul.f32 %v416, %v468
    %v490 = vmul.f32 %v417, %v472
    %v491 = vmul.f32 %v418, %v452
    %v492 = vmul.f32 %v419, %v456
    %v493 = vmul.f32 %v420, %v460
    %v494 = vmul.f32 %v421, %v464
    %v495 = vmul.f32 %v422, %v468
    %v496 = vmul.f32 %v423, %v472
    %v497 = vmul.f32 %v424, %v452
    %v498 = vmul.f32 %v425, %v456
    %v499 = vmul.f32 %v426, %v460
    %v500 = vmul.f32 %v427, %v464
    %v501 = vmul.f32 %v428, %v468
    %v502 = vmul.f32 %v429, %v472
    %v503 = vmul.f32 %v430, %v452
    %v504 = vmul.f32 %v431, %v456
    %v505 = vmul.f32 %v432, %v460
    %v506 = vmul.f32 %v433, %v464
    %v507 = vmul.f32 %v434, %v468
    %v508 = vmul.f32 %v435, %v472
    %v509 = vmul.f32 %v436, %v452
    %v510 = vmul.f32 %v437, %v456
    %v511 = vmul.f32 %v438, %v460
    %v512 = vmul.f32 %v439, %v464
    %v513 = vmul.f32 %v440, %v468
    %v514 = vmul.f32 %v441, %v472
    %v515 = vmul.f32 %v442, %v452
    %v516 = vmul.f32 %v443, %v456
    %v517 = vmul.f32 %v444, %v460
    %v518 = vmul.f32 %v445, %v464
    %v519 = vmul.f32 %v446, %v468
    %v520 = vmul.f32 %v447, %v472
    %v522 = vlaneseq
    %v523 = vshrl.u32 %v522, 7
    %v524 = vsub.s32 0, %v523
    %v525 = vrot.slane %v405, %v524
    %v526 = vlaneseq
    %v527 = vshrl.u32 %v526, 7
    %v528 = vsub.s32 1, %v527
    %v529 = vrot.slane %v405, %v528
    %v530 = vlaneseq
    %v531 = vshrl.u32 %v530, 7
    %v532 = vsub.s32 2, %v531
    %v533 = vrot.slane %v405, %v532
    %v534 = vlaneseq
    %v535 = vshrl.u32 %v534, 7
    %v536 = vsub.s32 3, %v535
    %v537 = vrot.slane %v405, %v536
    %v538 = vlaneseq
    %v539 = vshrl.u32 %v538, 7
    %v540 = vsub.s32 4, %v539
    %v541 = vrot.slane %v405, %v540
    %v542 = vlaneseq
    %v543 = vshrl.u32 %v542, 7
    %v544 = vsub.s32 5, %v543
    %v545 = vrot.slane %v405, %v544
    %v552 = vadd.f32 %v479, %v525
    %v553 = vadd.f32 %v480, %v529
    %v554 = vadd.f32 %v481, %v533
    %v555 = vadd.f32 %v482, %v537
    %v556 = vadd.f32 %v483, %v541
    %v557 = vadd.f32 %v484, %v545
    %v558 = vadd.f32 %v485, %v525
    %v559 = vadd.f32 %v486, %v529
    %v560 = vadd.f32 %v487, %v533
    %v561 = vadd.f32 %v488, %v537
    %v562 = vadd.f32 %v489, %v541
    %v563 = vadd.f32 %v490, %v545
    %v564 = vadd.f32 %v491, %v525
    %v565 = vadd.f32 %v492, %v529
    %v566 = vadd.f32 %v493, %v533
    %v567 = vadd.f32 %v494, %v537
    %v568 = vadd.f32 %v495, %v541
    %v569 = vadd.f32 %v496, %v545
    %v570 = vadd.f32 %v497, %v525
    %v571 = vadd.f32 %v498, %v529
    %v572 = vadd.f32 %v499, %v533
    %v573 = vadd.f32 %v500, %v537
    %v574 = vadd.f32 %v501, %v541
    %v575 = vadd.f32 %v502, %v545
    %v576 = vadd.f32 %v503, %v525
    %v577 = vadd.f32 %v504, %v529
    %v578 = vadd.f32 %v505, %v533
    %v579 = vadd.f32 %v506, %v537
    %v580 = vadd.f32 %v507, %v541
    %v581 = vadd.f32 %v508, %v545
    %v582 = vadd.f32 %v509, %v525
    %v583 = vadd.f32 %v510, %v529
    %v584 = vadd.f32 %v511, %v533
    %v585 = vadd.f32 %v512, %v537
    %v586 = vadd.f32 %v513, %v541
    %v587 = vadd.f32 %v514, %v545
    %v588 = vadd.f32 %v515, %v525
    %v589 = vadd.f32 %v516, %v529
    %v590 = vadd.f32 %v517, %v533
    %v591 = vadd.f32 %v518, %v537
    %v592 = vadd.f32 %v519, %v541
    %v593 = vadd.f32 %v520, %v545
    %594 = vst [vmem:[#allocation8] sm:$0xff] %v552
    %595 = vst [vmem:[#allocation8 + $0x8] sm:$0xff] %v553
    %596 = vst [vmem:[#allocation8 + $0x10] sm:$0xff] %v554
    %597 = vst [vmem:[#allocation8 + $0x18] sm:$0xff] %v555
    %598 = vst [vmem:[#allocation8 + $0x20] sm:$0xff] %v556
    %599 = vst [vmem:[#allocation8 + $0x28] sm:$0xff] %v557
    %600 = vst [vmem:[#allocation8 + $0x30] sm:$0xff] %v558
    %601 = vst [vmem:[#allocation8 + $0x38] sm:$0xff] %v559
    %602 = vst [vmem:[#allocation8 + $0x40] sm:$0xff] %v560
    %603 = vst [vmem:[#allocation8 + $0x48] sm:$0xff] %v561
    %604 = vst [vmem:[#allocation8 + $0x50] sm:$0xff] %v562
    %605 = vst [vmem:[#allocation8 + $0x58] sm:$0xff] %v563
    %606 = vst [vmem:[#allocation8 + $0x60] sm:$0xff] %v564
    %607 = vst [vmem:[#allocation8 + $0x68] sm:$0xff] %v565
    %608 = vst [vmem:[#allocation8 + $0x70] sm:$0xff] %v566
    %609 = vst [vmem:[#allocation8 + $0x78] sm:$0xff] %v567
    %610 = vst [vmem:[#allocation8 + $0x80] sm:$0xff] %v568
    %611 = vst [vmem:[#allocation8 + $0x88] sm:$0xff] %v569
    %612 = vst [vmem:[#allocation8 + $0x90] sm:$0xff] %v570
    %613 = vst [vmem:[#allocation8 + $0x98] sm:$0xff] %v571
    %614 = vst [vmem:[#allocation8 + $0xa0] sm:$0xff] %v572
    %615 = vst [vmem:[#allocation8 + $0xa8] sm:$0xff] %v573
    %616 = vst [vmem:[#allocation8 + $0xb0] sm:$0xff] %v574
    %617 = vst [vmem:[#allocation8 + $0xb8] sm:$0xff] %v575
    %618 = vst [vmem:[#allocation8 + $0xc0] sm:$0xff] %v576
    %619 = vst [vmem:[#allocation8 + $0xc8] sm:$0xff] %v577
    %620 = vst [vmem:[#allocation8 + $0xd0] sm:$0xff] %v578
    %621 = vst [vmem:[#allocation8 + $0xd8] sm:$0xff] %v579
    %622 = vst [vmem:[#allocation8 + $0xe0] sm:$0xff] %v580
    %623 = vst [vmem:[#allocation8 + $0xe8] sm:$0xff] %v581
    %624 = vst [vmem:[#allocation8 + $0xf0] sm:$0xff] %v582
    %625 = vst [vmem:[#allocation8 + $0xf8] sm:$0xff] %v583
    %626 = vst [vmem:[#allocation8 + $0x100] sm:$0xff] %v584
    %627 = vst [vmem:[#allocation8 + $0x108] sm:$0xff] %v585
    %628 = vst [vmem:[#allocation8 + $0x110] sm:$0xff] %v586
    %629 = vst [vmem:[#allocation8 + $0x118] sm:$0xff] %v587
    %630 = vst [vmem:[#allocation8 + $0x120] sm:$0x1] %v588
    %631 = vst [vmem:[#allocation8 + $0x128] sm:$0x1] %v589
    %632 = vst [vmem:[#allocation8 + $0x130] sm:$0x1] %v590
    %633 = vst [vmem:[#allocation8 + $0x138] sm:$0x1] %v591
    %634 = vst [vmem:[#allocation8 + $0x140] sm:$0x1] %v592
    %635 = vst [vmem:[#allocation8 + $0x148] sm:$0x1] %v593
    // Predicated region
    $region26: #{tpu_custom_call.1} parent=1 // pred_check
      _
    $region27: #{tpu_custom_call.1} parent=1 // pred_check_branch
      %637 = sbr.rel (0) target = $region29
    $region28: #{tpu_custom_call.1} parent=1 // pred_region
      %s639 = ssub.s32 5376, 5376
      %640 = vsyncadd [#allocation4], %s639
      %s641 = sshll.u32 [#allocation8], 4
      %s642 = int_to_ptr.vmem [resolvable:$true] %s641
      %647 = dma.vmem_to_hbm [thread:$0]  %s642, 5376, %s3, [#allocation4], 768, 768, 48
    $region29: #{tpu_custom_call.1} parent=1 // pred_fallthru
      _
    // Predicated region
    $region30: #{tpu_custom_call.1} parent=1 // pred_check
      _
    $region31: #{tpu_custom_call.1} parent=1 // pred_check_branch
      %649 = sbr.rel (0) target = $region33
    $region32: #{tpu_custom_call.1} parent=1 // pred_region
      %650 = dma.done [#allocation4], 5376
    $region33: #{tpu_custom_call.1} parent=1 // pred_fallthru
      _
    %651 = vsyncpa [#allocation3], 1
    %652 = vsyncpa [#allocation6], 1
    %653 = vsyncpa [#allocation4], 1

</llo_original>
